<compile_context>
chip_gen: v6e
topology: v6e:2x2x1
jax: 0.10.0
libtpu: 0.0.40
codegen_flags: <defaults>
</compile_context>

<pallas_src>
import math

import jax
import jax.numpy as jnp
from jax.experimental import pallas as pl
from jax.experimental.pallas import tpu as pltpu


def _make_kernel(inv_hw, hw, thw, mask_tail):
    """Fused pool + linear kernel; 1/(H*W), HW and the tile size are baked in."""

    def kernel(x_ref, w_ref, b_ref, o_ref, acc_ref):
        k = pl.program_id(1)

        @pl.when(k == 0)
        def _init():
            acc_ref[...] = jnp.zeros_like(acc_ref)

        xb = x_ref[...].astype(jnp.float32)           # (tb, C, thw)
        if mask_tail:
            # Ragged HW tail: zero lanes past the true spatial extent before
            # summing (padded lanes of a partial block are undefined).
            lane = jax.lax.broadcasted_iota(jnp.int32, xb.shape, 2)
            xb = jnp.where(lane < (hw - k * thw), xb, 0.0)

        # Partial spatial sum (lane reduction). Kept as a flat (tb, C) f32
        # accumulator: a (tb, C, 1) keepdims layout would avoid a per-step
        # relayout but pads every row to 128 lanes of VMEM, which costs more
        # than the XLU work it saves here.
        acc_ref[...] += jnp.sum(xb, axis=2)

        @pl.when(k == pl.num_programs(1) - 1)
        def _epilogue():
            mean = acc_ref[...] * inv_hw              # f32 mean over H*W
            o_ref[...] = (jnp.dot(mean, w_ref[...].astype(jnp.float32),
                                  preferred_element_type=jnp.float32)
                          + b_ref[...]).astype(o_ref.dtype)

    return kernel


def _vmem_capacity_bytes():
    try:
        return int(pltpu.get_tpu_info().vmem_capacity_bytes)
    except Exception:
        return 64 * 1024 * 1024   # conservative (v7x-sized) fallback


def im_feat_to_word_vec(x, w_t, bias):
    """x: (B, C, H, W); w_t: (C, D) == Linear.weight.T; bias: (D,) -> (B, D) f32."""
    B, C, H, W = x.shape
    D = w_t.shape[1]
    HW = H * W
    itemsize = jnp.dtype(x.dtype).itemsize
    w_itemsize = jnp.dtype(w_t.dtype).itemsize

    # NCHW -> (B, C, HW): free reshape; HW lands on TPU lanes (lane-dense).
    x3 = x.reshape(B, C, HW)

    # ---- generation-aware VMEM budget --------------------------------------
    vmem_cap = _vmem_capacity_bytes()
    vmem_limit = (vmem_cap * 3) // 4       # ~96 MiB on v5e/v6e, ~48 MiB on v7x
    per_buf_cap = vmem_cap // 8            # per x buffer: 16 MiB / 8 MiB

    # ---- batch tile ---------------------------------------------------------
    # tb == B (full dim) for small batches (no ragged batch block at all);
    # otherwise 256 rows (multiple of 8; ragged final block handled by Pallas,
    # garbage OOB rows never reach the output).
    tb = B if B <= 256 else 256

    # ---- spatial tile from the byte budget ---------------------------------
    min_thw = 512 if itemsize >= 4 else 1024   # keep DMA runs >= ~2 KiB

    def x_budget(tb_):
        fixed = (2 * C * D * w_itemsize            # (double-buffered) weight
                 + 2 * tb_ * max(D, 128) * 4       # double-buffered output
                 + tb_ * max(C, 8) * 4             # accumulator scratch
                 + (1 << 20))                      # slack (bias, descriptors)
        return max(vmem_limit - fixed, 2 * (1 << 20))

    # Shrink the batch tile if even a min_thw-wide block would not fit.
    while tb > 8 and min(x_budget(tb) // 2, per_buf_cap) // (tb * C * itemsize) < min_thw:
        tb = max(8, ((tb // 2) // 8) * 8)

    per_buf = min(x_budget(tb) // 2, per_buf_cap)
    max_thw = per_buf // (tb * C * itemsize)
    if max_thw >= HW or HW <= 128:
        thw = HW                                   # single k step, contiguous rows
    else:
        thw = max((max_thw // 128) * 128, 128)     # lane-aligned partial tile

    nb = -(-B // tb)
    nhw = -(-HW // thw)
    mask_tail = (HW % thw) != 0

    bias2 = bias.reshape(1, D).astype(jnp.float32)

    out = pl.pallas_call(
        _make_kernel(1.0 / float(HW), HW, thw, mask_tail),
        out_shape=jax.ShapeDtypeStruct((B, D), jnp.float32),
        grid_spec=pltpu.PrefetchScalarGridSpec(
            num_scalar_prefetch=0,
            grid=(nb, nhw),
            in_specs=[pl.BlockSpec((tb, C, thw), lambda i, k: (i, 0, k)),
                      pl.BlockSpec((C, D), lambda i, k: (0, 0)),
                      pl.BlockSpec((1, D), lambda i, k: (0, 0))],
            out_specs=pl.BlockSpec((tb, D), lambda i, k: (i, 0)),
            scratch_shapes=[pltpu.VMEM((tb, C), jnp.float32)]),
        compiler_params=pltpu.CompilerParams(
            dimension_semantics=("parallel", "arbitrary"),
            vmem_limit_bytes=int(vmem_limit)),
        cost_estimate=pl.CostEstimate(
            flops=int(B * C * HW + 2 * B * C * D),
            transcendentals=0,
            bytes_accessed=int(B * C * HW * itemsize + C * D * w_itemsize
                               + D * 4 + B * D * 4)),
    )(x3, w_t, bias2)
    return out


if __name__ == "__main__":
    # Small shapes consistent with the module: a (B, C, H, W) feature map
    # pooled to (B, C) and projected to a D-dim word vector.
    B, C, H, W = 2, 64, 16, 16
    D = 128                                   # lane-dense output width

    key = jax.random.PRNGKey(0)
    kx, kw, kb = jax.random.split(key, 3)
    x = jax.random.normal(kx, (B, C, H, W), jnp.float32)
    bound = 1.0 / math.sqrt(C)                # PyTorch nn.Linear default init
    w_t = jax.random.uniform(kw, (C, D), jnp.float32, -bound, bound)
    bias = jax.random.uniform(kb, (D,), jnp.float32, -bound, bound)

    fwd = jax.jit(im_feat_to_word_vec)
    out = jax.block_until_ready(fwd(x, w_t, bias))

    # Pure-JAX reference (exact PyTorch forward semantics).
    ref = jnp.mean(x.reshape(B, C, H * W), axis=2) @ w_t + bias

    assert out.shape == (B, D), out.shape
    assert bool(jnp.all(jnp.isfinite(out)))
    max_err = float(jnp.max(jnp.abs(out - ref)))
    assert max_err < 1e-3, f"max abs error {max_err}"
    print("KERNEL_OK")
</pallas_src>

<mosaic_0001>
module attributes {stable_mosaic.version = 11 : i64} {
  func.func @kernel(%arg0: i32, %arg1: i32, %arg2: memref<2x64x256xf32, #tpu.memory_space<vmem>>, %arg3: memref<64x128xf32, #tpu.memory_space<vmem>>, %arg4: memref<1x128xf32, #tpu.memory_space<vmem>>, %arg5: memref<2x128xf32, #tpu.memory_space<vmem>>, %arg6: memref<2x64xf32, #tpu.memory_space<vmem>>) attributes {dimension_semantics = [#tpu.dimension_semantics<parallel>, #tpu.dimension_semantics<arbitrary>], iteration_bounds = array<i64: 1, 1>, scalar_prefetch = 0 : i64, scratch_operands = 1 : i64, tpu.core_type = #tpu.core_type<tc>, window_params = [{transform_indices = @transform_0, window_bounds = array<i64: 2, 64, 256>}, {pipeline_mode = #tpu.pipeline_mode<synchronous>, transform_indices = @transform_1, window_bounds = array<i64: 64, 128>}, {pipeline_mode = #tpu.pipeline_mode<synchronous>, transform_indices = @transform_2, window_bounds = array<i64: 1, 128>}, {transform_indices = @transform_3, window_bounds = array<i64: 2, 128>}]} {
    %c0_i32 = arith.constant 0 : i32
    %0 = arith.cmpi eq, %arg1, %c0_i32 : i32
    %1 = arith.extui %0 : i1 to i32
    %c0_i32_0 = arith.constant 0 : i32
    %2 = arith.cmpi ne, %1, %c0_i32_0 : i32
    scf.if %2 {
      %cst_9 = arith.constant 0.000000e+00 : f32
      %11 = vector.broadcast %cst_9 : f32 to vector<2x64xf32>
      %c0_10 = arith.constant 0 : index
      %c0_11 = arith.constant 0 : index
      %12 = vector.load %arg6[%c0_10, %c0_11] : memref<2x64xf32, #tpu.memory_space<vmem>>, vector<2x64xf32>
      tpu.vector_store %arg6[%c0_10, %c0_11], %11 {strides = array<i32>} : memref<2x64xf32, #tpu.memory_space<vmem>>, vector<2x64xf32>,
    } else {
    }
    %c0 = arith.constant 0 : index
    %c0_1 = arith.constant 0 : index
    %c0_2 = arith.constant 0 : index
    %3 = vector.load %arg2[%c0, %c0_1, %c0_2] : memref<2x64x256xf32, #tpu.memory_space<vmem>>, vector<2x64x256xf32>
    %c0_3 = arith.constant 0 : index
    %c0_4 = arith.constant 0 : index
    %4 = vector.load %arg6[%c0_3, %c0_4] : memref<2x64xf32, #tpu.memory_space<vmem>>, vector<2x64xf32>
    %cst = arith.constant dense<0.000000e+00> : vector<2x64xf32>
    %5 = vector.multi_reduction <add>, %3, %cst [2] : vector<2x64x256xf32> to vector<2x64xf32>
    %6 = arith.addf %4, %5 : vector<2x64xf32>
    %c0_5 = arith.constant 0 : index
    %c0_6 = arith.constant 0 : index
    %7 = vector.load %arg6[%c0_5, %c0_6] : memref<2x64xf32, #tpu.memory_space<vmem>>, vector<2x64xf32>
    tpu.vector_store %arg6[%c0_5, %c0_6], %6 {strides = array<i32>} : memref<2x64xf32, #tpu.memory_space<vmem>>, vector<2x64xf32>,
    %c0_i32_7 = arith.constant 0 : i32
    %8 = arith.cmpi eq, %arg1, %c0_i32_7 : i32
    %9 = arith.extui %8 : i1 to i32
    %c0_i32_8 = arith.constant 0 : i32
    %10 = arith.cmpi ne, %9, %c0_i32_8 : i32
    scf.if %10 {
      %c0_9 = arith.constant 0 : index
      %c0_10 = arith.constant 0 : index
      %11 = vector.load %arg6[%c0_9, %c0_10] : memref<2x64xf32, #tpu.memory_space<vmem>>, vector<2x64xf32>
      %cst_11 = arith.constant 3.906250e-03 : f32
      %12 = vector.broadcast %cst_11 : f32 to vector<2x64xf32>
      %13 = arith.mulf %11, %12 : vector<2x64xf32>
      %c0_12 = arith.constant 0 : index
      %c0_13 = arith.constant 0 : index
      %14 = vector.load %arg3[%c0_12, %c0_13] : memref<64x128xf32, #tpu.memory_space<vmem>>, vector<64x128xf32>
      %cst_14 = arith.constant dense<0.000000e+00> : vector<2x128xf32>
      %15 = tpu.matmul %13, %14, %cst_14 {dimension_numbers = #tpu.dot_dimension_numbers<[1], [0], [0], [1], [0, 0, 1, 1], [], []>} : vector<2x64xf32>, vector<64x128xf32>, vector<2x128xf32> -> vector<2x128xf32>
      %c0_15 = arith.constant 0 : index
      %c0_16 = arith.constant 0 : index
      %16 = vector.load %arg4[%c0_15, %c0_16] : memref<1x128xf32, #tpu.memory_space<vmem>>, vector<1x128xf32>
      %17 = vector.broadcast %16 : vector<1x128xf32> to vector<2x128xf32>
      %18 = arith.addf %15, %17 : vector<2x128xf32>
      %c0_17 = arith.constant 0 : index
      %c0_18 = arith.constant 0 : index
      %19 = vector.load %arg5[%c0_17, %c0_18] : memref<2x128xf32, #tpu.memory_space<vmem>>, vector<2x128xf32>
      tpu.vector_store %arg5[%c0_17, %c0_18], %18 {strides = array<i32>} : memref<2x128xf32, #tpu.memory_space<vmem>>, vector<2x128xf32>,
    } else {
    }
    return
  }
  func.func @transform_0(%arg0: i32, %arg1: i32) -> (i32, i32, i32) {
    %c0_i32 = arith.constant 0 : i32
    %c0_i32_0 = arith.constant 0 : i32
    return %arg0, %c0_i32, %arg1 : i32, i32, i32
  }
  func.func @transform_1(%arg0: i32, %arg1: i32) -> (i32, i32) {
    %c0_i32 = arith.constant 0 : i32
    %c0_i32_0 = arith.constant 0 : i32
    %c0_i32_1 = arith.constant 0 : i32
    return %c0_i32, %c0_i32_0 : i32, i32
  }
  func.func @transform_2(%arg0: i32, %arg1: i32) -> (i32, i32) {
    %c0_i32 = arith.constant 0 : i32
    %c0_i32_0 = arith.constant 0 : i32
    %c0_i32_1 = arith.constant 0 : i32
    return %c0_i32, %c0_i32_0 : i32, i32
  }
  func.func @transform_3(%arg0: i32, %arg1: i32) -> (i32, i32) {
    %c0_i32 = arith.constant 0 : i32
    %c0_i32_0 = arith.constant 0 : i32
    return %arg0, %c0_i32 : i32, i32
  }
}

</mosaic_0001>

<llo_original>
// kernel: im_feat_to_word_vec.1
$region0: #{im_feat_to_word_vec.1}
  #allocation0 [shape = 'u32[]', space=smem, size = 0x4, offset = 0x4, fixed_abs, tag = 'smem constant byte address 0x4 - core index']
  #allocation1 [shape = 'u32[144,128]{1,0:T(1,128)}', space=vmem, size = 0x12000, scoped, tag = 'internal scratch']
  #allocation2 [shape = 'f32[2,64]{1,0:T(2,128)}', space=vmem, size = 0x400, scoped, tag = 'scratch operand']
  %s0 = inlined_call_operand.vmem [shape: f32[2,64,256], index: 0, kind: input, shape index: {}]
  %s1 = inlined_call_operand.vmem [shape: f32[64,128], index: 1, kind: input, shape index: {}]
  %s2 = inlined_call_operand.vmem [shape: f32[1,128], index: 2, kind: input, shape index: {}]
  %s3 = inlined_call_operand.hbm [shape: f32[2,128], index: 3, kind: output, shape index: {}]
  %s4 = sld [smem:[#allocation0]]
  $region30: #{im_feat_to_word_vec.1} parent=0
    _
  %s6 = ssub.s32 1, %s4
  %s7 = scalar_select 0, %s6, %s4
  $region1: #{im_feat_to_word_vec.1} parent=0
    #allocation3 [shape = 'u8[1024]{0}', space=vmem, size = 0x400, scoped, tag = 'output window, operand 0, single buffered']
    #allocation4 [shape = 's32[1]{0}', space=sflag, size = 0x4, scoped, tag = 'scoped memory for im_feat_to_word_vec.1']
    %8 = vsyncpa [#allocation4], 0
    // Predicated region
    $region2: #{im_feat_to_word_vec.1} parent=1 // pred_check
      _
    $region3: #{im_feat_to_word_vec.1} parent=1 // pred_check_branch
      %10 = sbr.rel (0) target = $region5
    $region4: #{im_feat_to_word_vec.1} parent=1 // pred_region
      _
    $region5: #{im_feat_to_word_vec.1} parent=1 // pred_fallthru
      _
    // Predicated region
    $region6: #{im_feat_to_word_vec.1} parent=1 // pred_check
      _
    $region7: #{im_feat_to_word_vec.1} parent=1 // pred_check_branch
      %12 = sbr.rel (0) target = $region9
    $region8: #{im_feat_to_word_vec.1} parent=1 // pred_region
      _
    $region9: #{im_feat_to_word_vec.1} parent=1 // pred_fallthru
      _
    // Predicated region
    $region10: #{im_feat_to_word_vec.1} parent=1 // pred_check
      _
    $region11: #{im_feat_to_word_vec.1} parent=1 // pred_check_branch
      %14 = sbr.rel (0) target = $region13
    $region12: #{im_feat_to_word_vec.1} parent=1 // pred_region
      _
    $region13: #{im_feat_to_word_vec.1} parent=1 // pred_fallthru
      _
    %p15 = scmp.eq.s32.totalorder 0, 0
    // Predicated region
    $region14: #{im_feat_to_word_vec.1} parent=1 // pred_check
      %p16 = pneg %p15
    $region15: #{im_feat_to_word_vec.1} parent=1 // pred_check_branch
      %18 = sbr.rel (%p16) target = $region17
    $region16: #{im_feat_to_word_vec.1} parent=1 // pred_region
      %vm19 = vcmask 517120
      %20 = vst.msk [vmem:[#allocation2] sm:$0x3] %vm19, 0.0
    $region17: #{im_feat_to_word_vec.1} parent=1 // pred_fallthru
      _
    %v21 = vld [vmem:[%s0] sm:$0xff]
    %v22 = vld [vmem:[%s0 + $0x8] sm:$0xff]
    %v23 = vld [vmem:[%s0 + $0x10] sm:$0xff]
    %v24 = vld [vmem:[%s0 + $0x18] sm:$0xff]
    %v25 = vld [vmem:[%s0 + $0x20] sm:$0xff]
    %v26 = vld [vmem:[%s0 + $0x28] sm:$0xff]
    %v27 = vld [vmem:[%s0 + $0x30] sm:$0xff]
    %v28 = vld [vmem:[%s0 + $0x38] sm:$0xff]
    %v29 = vld [vmem:[%s0 + $0x40] sm:$0xff]
    %v30 = vld [vmem:[%s0 + $0x48] sm:$0xff]
    %v31 = vld [vmem:[%s0 + $0x50] sm:$0xff]
    %v32 = vld [vmem:[%s0 + $0x58] sm:$0xff]
    %v33 = vld [vmem:[%s0 + $0x60] sm:$0xff]
    %v34 = vld [vmem:[%s0 + $0x68] sm:$0xff]
    %v35 = vld [vmem:[%s0 + $0x70] sm:$0xff]
    %v36 = vld [vmem:[%s0 + $0x78] sm:$0xff]
    %v37 = vld [vmem:[%s0 + $0x80] sm:$0xff]
    %v38 = vld [vmem:[%s0 + $0x88] sm:$0xff]
    %v39 = vld [vmem:[%s0 + $0x90] sm:$0xff]
    %v40 = vld [vmem:[%s0 + $0x98] sm:$0xff]
    %v41 = vld [vmem:[%s0 + $0xa0] sm:$0xff]
    %v42 = vld [vmem:[%s0 + $0xa8] sm:$0xff]
    %v43 = vld [vmem:[%s0 + $0xb0] sm:$0xff]
    %v44 = vld [vmem:[%s0 + $0xb8] sm:$0xff]
    %v45 = vld [vmem:[%s0 + $0xc0] sm:$0xff]
    %v46 = vld [vmem:[%s0 + $0xc8] sm:$0xff]
    %v47 = vld [vmem:[%s0 + $0xd0] sm:$0xff]
    %v48 = vld [vmem:[%s0 + $0xd8] sm:$0xff]
    %v49 = vld [vmem:[%s0 + $0xe0] sm:$0xff]
    %v50 = vld [vmem:[%s0 + $0xe8] sm:$0xff]
    %v51 = vld [vmem:[%s0 + $0xf0] sm:$0xff]
    %v52 = vld [vmem:[%s0 + $0xf8] sm:$0xff]
    %v53 = vld [vmem:[#allocation2] sm:$0x3]
    %v54 = vadd.f32 %v21, %v22
    %55 = vadd.xlane.f32.xlu0 %v54
    %v56 = vpop.xlane.xlu0 %55
    %v57 = vadd.f32 %v23, %v24
    %58 = vadd.xlane.f32.xlu0 %v57
    %v59 = vpop.xlane.xlu0 %58
    %v60 = vadd.f32 %v25, %v26
    %61 = vadd.xlane.f32.xlu0 %v60
    %v62 = vpop.xlane.xlu0 %61
    %v63 = vadd.f32 %v27, %v28
    %64 = vadd.xlane.f32.xlu0 %v63
    %v65 = vpop.xlane.xlu0 %64
    %v66 = vadd.f32 %v29, %v30
    %67 = vadd.xlane.f32.xlu0 %v66
    %v68 = vpop.xlane.xlu0 %67
    %v69 = vadd.f32 %v31, %v32
    %70 = vadd.xlane.f32.xlu0 %v69
    %v71 = vpop.xlane.xlu0 %70
    %v72 = vadd.f32 %v33, %v34
    %73 = vadd.xlane.f32.xlu0 %v72
    %v74 = vpop.xlane.xlu0 %73
    %v75 = vadd.f32 %v35, %v36
    %76 = vadd.xlane.f32.xlu0 %v75
    %v77 = vpop.xlane.xlu0 %76
    %v78 = vadd.f32 %v37, %v38
    %79 = vadd.xlane.f32.xlu0 %v78
    %v80 = vpop.xlane.xlu0 %79
    %v81 = vadd.f32 %v39, %v40
    %82 = vadd.xlane.f32.xlu0 %v81
    %v83 = vpop.xlane.xlu0 %82
    %v84 = vadd.f32 %v41, %v42
    %85 = vadd.xlane.f32.xlu0 %v84
    %v86 = vpop.xlane.xlu0 %85
    %v87 = vadd.f32 %v43, %v44
    %88 = vadd.xlane.f32.xlu0 %v87
    %v89 = vpop.xlane.xlu0 %88
    %v90 = vadd.f32 %v45, %v46
    %91 = vadd.xlane.f32.xlu0 %v90
    %v92 = vpop.xlane.xlu0 %91
    %v93 = vadd.f32 %v47, %v48
    %94 = vadd.xlane.f32.xlu0 %v93
    %v95 = vpop.xlane.xlu0 %94
    %v96 = vadd.f32 %v49, %v50
    %97 = vadd.xlane.f32.xlu0 %v96
    %v98 = vpop.xlane.xlu0 %97
    %v99 = vadd.f32 %v51, %v52
    %100 = vadd.xlane.f32.xlu0 %v99
    %v101 = vpop.xlane.xlu0 %100
    %v118 = vlaneseq
    %v119 = vand.u32 %v118, 127
    %v120 = vlaneseq
    %v121 = vshrl.u32 %v120, 7
    %v122 = vsub.s32 %v119, %v121
    %v123 = vrot.slane %v56, %v122
    %v124 = vadd.s32 %v119, 4294967288
    %v125 = vlaneseq
    %v126 = vshrl.u32 %v125, 7
    %v127 = vsub.s32 %v124, %v126
    %v128 = vrot.slane %v59, %v127
    %vm129 = vcmask 130112
    %v130 = vsel %vm129, %v128, %v123
    %v131 = vadd.s32 %v119, 4294967280
    %v132 = vlaneseq
    %v133 = vshrl.u32 %v132, 7
    %v134 = vsub.s32 %v131, %v133
    %v135 = vrot.slane %v62, %v134
    %vm136 = vcmask 195712
    %v137 = vsel %vm136, %v135, %v130
    %v138 = vadd.s32 %v119, 4294967272
    %v139 = vlaneseq
    %v140 = vshrl.u32 %v139, 7
    %v141 = vsub.s32 %v138, %v140
    %v142 = vrot.slane %v65, %v141
    %vm143 = vcmask 261312
    %v144 = vsel %vm143, %v142, %v137
    %v145 = vadd.s32 %v119, 4294967264
    %v146 = vlaneseq
    %v147 = vshrl.u32 %v146, 7
    %v148 = vsub.s32 %v145, %v147
    %v149 = vrot.slane %v68, %v148
    %vm150 = vcmask 326912
    %v151 = vsel %vm150, %v149, %v144
    %v152 = vadd.s32 %v119, 4294967256
    %v153 = vlaneseq
    %v154 = vshrl.u32 %v153, 7
    %v155 = vsub.s32 %v152, %v154
    %v156 = vrot.slane %v71, %v155
    %vm157 = vcmask 392512
    %v158 = vsel %vm157, %v156, %v151
    %v159 = vadd.s32 %v119, 4294967248
    %v160 = vlaneseq
    %v161 = vshrl.u32 %v160, 7
    %v162 = vsub.s32 %v159, %v161
    %v163 = vrot.slane %v74, %v162
    %vm164 = vcmask 458112
    %v165 = vsel %vm164, %v163, %v158
    %v166 = vadd.s32 %v119, 4294967240
    %v167 = vlaneseq
    %v168 = vshrl.u32 %v167, 7
    %v169 = vsub.s32 %v166, %v168
    %v170 = vrot.slane %v77, %v169
    %vm171 = vcmask 523712
    %v172 = vsel %vm171, %v170, %v165
    %v173 = vlaneseq
    %v174 = vshrl.u32 %v173, 7
    %v175 = vsub.s32 %v119, %v174
    %v176 = vrot.slane %v80, %v175
    %v177 = vlaneseq
    %v178 = vshrl.u32 %v177, 7
    %v179 = vsub.s32 %v124, %v178
    %v180 = vrot.slane %v83, %v179
    %v181 = vsel %vm129, %v180, %v176
    %v182 = vlaneseq
    %v183 = vshrl.u32 %v182, 7
    %v184 = vsub.s32 %v131, %v183
    %v185 = vrot.slane %v86, %v184
    %v186 = vsel %vm136, %v185, %v181
    %v187 = vlaneseq
    %v188 = vshrl.u32 %v187, 7
    %v189 = vsub.s32 %v138, %v188
    %v190 = vrot.slane %v89, %v189
    %v191 = vsel %vm143, %v190, %v186
    %v192 = vlaneseq
    %v193 = vshrl.u32 %v192, 7
    %v194 = vsub.s32 %v145, %v193
    %v195 = vrot.slane %v92, %v194
    %v196 = vsel %vm150, %v195, %v191
    %v197 = vlaneseq
    %v198 = vshrl.u32 %v197, 7
    %v199 = vsub.s32 %v152, %v198
    %v200 = vrot.slane %v95, %v199
    %v201 = vsel %vm157, %v200, %v196
    %v202 = vlaneseq
    %v203 = vshrl.u32 %v202, 7
    %v204 = vsub.s32 %v159, %v203
    %v205 = vrot.slane %v98, %v204
    %v206 = vsel %vm164, %v205, %v201
    %v207 = vlaneseq
    %v208 = vshrl.u32 %v207, 7
    %v209 = vsub.s32 %v166, %v208
    %v210 = vrot.slane %v101, %v209
    %v211 = vsel %vm171, %v210, %v206
    %vm212 = vcmask 1041409
    %v213 = vsel %vm212, %v211, %v172
    %v215 = vadd.f32 %v53, %v213
    %vm216 = vcmask 517120
    %217 = vst.msk [vmem:[#allocation2] sm:$0x3] %vm216, %v215
    // Predicated region
    $region18: #{im_feat_to_word_vec.1} parent=1 // pred_check
      %p218 = pneg %p15
    $region19: #{im_feat_to_word_vec.1} parent=1 // pred_check_branch
      %220 = sbr.rel (%p218) target = $region21
    $region20: #{im_feat_to_word_vec.1} parent=1 // pred_region
      %v221 = vld [vmem:[#allocation2] sm:$0x3]
      %v222 = vmul.f32 %v221, 0.00390625
      %v223 = vld [vmem:[%s1] sm:$0xff]
      %v224 = vld [vmem:[%s1 + $0x8] sm:$0xff]
      %v225 = vld [vmem:[%s1 + $0x10] sm:$0xff]
      %v226 = vld [vmem:[%s1 + $0x18] sm:$0xff]
      %v227 = vld [vmem:[%s1 + $0x20] sm:$0xff]
      %v228 = vld [vmem:[%s1 + $0x28] sm:$0xff]
      %v229 = vld [vmem:[%s1 + $0x30] sm:$0xff]
      %v230 = vld [vmem:[%s1 + $0x38] sm:$0xff]
      %v231 = vld [vmem:[%s2] sm:$0x1]
      %v233 = vlaneseq
      %v234 = vshrl.u32 %v233, 7
      %v235 = vsub.s32 0, %v234
      %v236 = vrot.slane %v231, %v235
      %vm238 = vcmask 523264
      %v240 = vsel %vm238, %v222, 0
      %242 = vmatprep.subr.mxu0 0.0
      %243 = vmatpush1.msra.mxu0 0.0
      %244 = vmatprep.subr.mxu0 0.0
      %245 = vmatpush1.msra.mxu0 0.0
      %246 = vmatprep.subr.mxu0 0.0
      %247 = vmatpush1.msra.mxu0 0.0
      %248 = vmatprep.subr.mxu0 0.0
      %249 = vmatpush1.msra.mxu0 0.0
      %250 = vmatprep.subr.mxu0 0.0
      %251 = vmatpush1.msra.mxu0 0.0
      %252 = vmatprep.subr.mxu0 0.0
      %253 = vmatpush1.msra.mxu0 0.0
      %254 = vmatprep.subr.mxu0 0.0
      %255 = vmatpush1.msra.mxu0 0.0
      %256 = vmatprep.subr.mxu0 0.0
      %257 = vmatpush1.msra.mxu0 0.0
      %258 = vmatprep.subr.mxu0 0.0
      %259 = vmatpush1.msra.mxu0 %v230
      %260 = vmatprep.subr.mxu0 0.0
      %261 = vmatpush1.msra.mxu0 %v229
      %262 = vmatprep.subr.mxu0 0.0
      %263 = vmatpush1.msra.mxu0 %v228
      %264 = vmatprep.subr.mxu0 0.0
      %265 = vmatpush1.msra.mxu0 %v227
      %266 = vmatprep.subr.mxu0 0.0
      %267 = vmatpush1.msra.mxu0 %v226
      %268 = vmatprep.subr.mxu0 0.0
      %269 = vmatpush1.msra.mxu0 %v225
      %270 = vmatprep.subr.mxu0 0.0
      %271 = vmatpush1.msra.mxu0 %v224
      %272 = vmatprep.subr.mxu0 0.0
      %273 = vmatpush1.msra.mxu0 %v223
      %274 = vmatprep.subr.mxu0 0.0
      %275 = vmatpush2.msra.mxu0 0.0
      %276 = vmatprep.subr.mxu0 0.0
      %277 = vmatpush2.msra.mxu0 0.0
      %278 = vmatprep.subr.mxu0 0.0
      %279 = vmatpush2.msra.mxu0 0.0
      %280 = vmatprep.subr.mxu0 0.0
      %281 = vmatpush2.msra.mxu0 0.0
      %282 = vmatprep.subr.mxu0 0.0
      %283 = vmatpush2.msra.mxu0 0.0
      %284 = vmatprep.subr.mxu0 0.0
      %285 = vmatpush2.msra.mxu0 0.0
      %286 = vmatprep.subr.mxu0 0.0
      %287 = vmatpush2.msra.mxu0 0.0
      %288 = vmatprep.subr.mxu0 0.0
      %289 = vmatpush2.msra.mxu0 0.0
      %290 = vmatprep.subr.mxu0 0.0
      %291 = vmatpush2.msra.mxu0 0.0
      %292 = vmatprep.subr.mxu0 0.0
      %293 = vmatpush2.msra.mxu0 0.0
      %294 = vmatprep.subr.mxu0 0.0
      %295 = vmatpush2.msra.mxu0 0.0
      %296 = vmatprep.subr.mxu0 0.0
      %297 = vmatpush2.msra.mxu0 0.0
      %298 = vmatprep.subr.mxu0 0.0
      %299 = vmatpush2.msra.mxu0 0.0
      %300 = vmatprep.subr.mxu0 0.0
      %301 = vmatpush2.msra.mxu0 0.0
      %302 = vmatprep.subr.mxu0 0.0
      %303 = vmatpush2.msra.mxu0 0.0
      %304 = vmatprep.subr.mxu0 0.0
      %305 = vmatpush2.msra.mxu0 0.0
      %306 = vmatprep.mubr.f32.mxu0 0.0
      %307 = vmatmul.mubr.f32.gmra.mxu0 %v240
      %v308 = vpop.f32.mrf.mxu0
      %v309 = vadd.f32 %v236, %v308
      %v310 = vpop.f32.mrf.mxu0
      %311 = vdwg.mxu0
      %312 = vst [vmem:[#allocation3] sm:$0x3] %v309
    $region21: #{im_feat_to_word_vec.1} parent=1 // pred_fallthru
      _
    // Predicated region
    $region22: #{im_feat_to_word_vec.1} parent=1 // pred_check
      _
    $region23: #{im_feat_to_word_vec.1} parent=1 // pred_check_branch
      %314 = sbr.rel (0) target = $region25
    $region24: #{im_feat_to_word_vec.1} parent=1 // pred_region
      %s316 = ssub.s32 32, 32
      %317 = vsyncadd [#allocation4], %s316
      %s319 = sshll.u32 [#allocation3], 4
      %s320 = int_to_ptr.vmem [resolvable:$true] %s319
      %322 = dma.vmem_to_hbm [thread:$0]  %s320, 32, %s3, [#allocation4]
    $region25: #{im_feat_to_word_vec.1} parent=1 // pred_fallthru
      _
    // Predicated region
    $region26: #{im_feat_to_word_vec.1} parent=1 // pred_check
      _
    $region27: #{im_feat_to_word_vec.1} parent=1 // pred_check_branch
      %324 = sbr.rel (0) target = $region29
    $region28: #{im_feat_to_word_vec.1} parent=1 // pred_region
      %325 = dma.done [#allocation4], 32
    $region29: #{im_feat_to_word_vec.1} parent=1 // pred_fallthru
      _
    %326 = vsyncpa [#allocation4], 1

</llo_original>
